<compile_context>
chip_gen: v5e
topology: v5e:2x2
jax: 0.10.0
libtpu: 0.0.40
codegen_flags: <defaults>
</compile_context>

<pallas_src>
import functools

import jax
import jax.numpy as jnp
from jax.experimental import pallas as pl
from jax.experimental.pallas import tpu as pltpu


_VMEM_LIMIT = 48 * 1024 * 1024  # headroom below physical on all gens (64 MiB on v7x)


def _pick_tm(M, prefs=(512, 256, 128, 64, 32, 16, 8)):
    """Largest row-tile that divides M (multiples of 8 so blocks stay tile-aligned)."""
    for t in prefs:
        if M % t == 0:
            return t
    return M  # full extent is always legal


def _compiler_params():
    return pltpu.CompilerParams(
        dimension_semantics=("parallel",),
        vmem_limit_bytes=_VMEM_LIMIT,
    )


# ---------------------------------------------------------------------------
# Kernel 1: plain matmul + bias (QKV projection)
# ---------------------------------------------------------------------------

def _matmul_bias_kernel(x_ref, w_ref, b_ref, o_ref):
    acc = jnp.dot(x_ref[...], w_ref[...], preferred_element_type=jnp.float32)
    acc = acc + b_ref[...].astype(jnp.float32)
    o_ref[...] = acc.astype(o_ref.dtype)


def matmul_bias(x, w, b):
    M, K = x.shape
    K2, N = w.shape
    assert K == K2
    tm = _pick_tm(M)
    return pl.pallas_call(
        _matmul_bias_kernel,
        out_shape=jax.ShapeDtypeStruct((M, N), x.dtype),
        grid=(M // tm,),
        in_specs=[
            pl.BlockSpec((tm, K), lambda i: (i, 0)),
            pl.BlockSpec((K, N), lambda i: (0, 0)),   # constant block -> DMA'd once
            pl.BlockSpec((1, N), lambda i: (0, 0)),
        ],
        out_specs=pl.BlockSpec((tm, N), lambda i: (i, 0)),
        compiler_params=_compiler_params(),
    )(x, w, b.reshape(1, N))


# ---------------------------------------------------------------------------
# Kernel 2: multi-head attention, all heads per batch, lane-dense [S, E] output
# ---------------------------------------------------------------------------

def _attn_kernel(qkv_ref, mask_ref, pad_ref, o_ref, *, num_heads, scale):
    E3 = qkv_ref.shape[-1]
    E = E3 // 3
    d = E // num_heads

    # bias built in-kernel: shared [S,S] float mask + per-batch [1,S] padding row.
    bias = mask_ref[...].astype(jnp.float32) + pad_ref[0].astype(jnp.float32)  # [S, S]

    outs = []
    for h in range(num_heads):  # H is small & static
        q = qkv_ref[0, :, h * d:(h + 1) * d].astype(jnp.float32) * scale      # [S, d]
        k = qkv_ref[0, :, E + h * d:E + (h + 1) * d].astype(jnp.float32)      # [S, d]
        v = qkv_ref[0, :, 2 * E + h * d:2 * E + (h + 1) * d].astype(jnp.float32)

        # q @ k^T without materializing the transpose.
        s = jax.lax.dot_general(q, k, (((1,), (1,)), ((), ())),
                                preferred_element_type=jnp.float32)           # [S, S]
        s = s + bias
        m = jnp.max(s, axis=-1, keepdims=True)
        p = jnp.exp(s - m)
        l = jnp.sum(p, axis=-1, keepdims=True)
        o = jnp.dot(p, v, preferred_element_type=jnp.float32)                 # [S, d]
        o = o * pl.reciprocal(l, approx=True)                                 # EUP
        outs.append(o)

    # Single lane-dense store of [S, E] (heads concatenated along last dim).
    o_ref[0] = jnp.concatenate(outs, axis=-1).astype(o_ref.dtype)
    # TODO(synk): for long S, convert to a flash-style online-softmax with a KV grid
    # axis so the [S, S] score block does not live in VMEM (matters on v7x, 64 MiB).


def multihead_attention(qkv, src_mask, pad_bias, *, num_heads, scale):
    # qkv: [B, S, 3E]; src_mask: [S, S] additive f32; pad_bias: [B, 1, S] additive f32.
    B, S, E3 = qkv.shape
    E = E3 // 3
    return pl.pallas_call(
        functools.partial(_attn_kernel, num_heads=num_heads, scale=scale),
        out_shape=jax.ShapeDtypeStruct((B, S, E), qkv.dtype),
        grid=(B,),
        in_specs=[
            pl.BlockSpec((1, S, E3), lambda b: (b, 0, 0)),
            pl.BlockSpec((S, S), lambda b: (0, 0)),
            pl.BlockSpec((1, 1, S), lambda b: (b, 0, 0)),
        ],
        out_specs=pl.BlockSpec((1, S, E), lambda b: (b, 0, 0)),
        compiler_params=_compiler_params(),
    )(qkv, src_mask, pad_bias)


# ---------------------------------------------------------------------------
# Kernel 3: out_proj matmul + residual add + LayerNorm (fused epilogue)
# ---------------------------------------------------------------------------

def _proj_add_ln_kernel(x_ref, res_ref, w_ref, b_ref, g_ref, beta_ref, o_ref, *, eps):
    acc = jnp.dot(x_ref[...], w_ref[...], preferred_element_type=jnp.float32)
    z = acc + b_ref[...].astype(jnp.float32) + res_ref[...].astype(jnp.float32)
    mean = jnp.mean(z, axis=-1, keepdims=True)
    c = z - mean
    var = jnp.mean(c * c, axis=-1, keepdims=True)
    zn = c * jax.lax.rsqrt(var + eps)
    o_ref[...] = (zn * g_ref[...].astype(jnp.float32)
                  + beta_ref[...].astype(jnp.float32)).astype(o_ref.dtype)


def proj_add_layernorm(x, residual, w, b, gamma, beta, eps=1e-6):
    M, K = x.shape
    K2, N = w.shape
    assert K == K2
    tm = _pick_tm(M)
    return pl.pallas_call(
        functools.partial(_proj_add_ln_kernel, eps=eps),
        out_shape=jax.ShapeDtypeStruct((M, N), x.dtype),
        grid=(M // tm,),
        in_specs=[
            pl.BlockSpec((tm, K), lambda i: (i, 0)),
            pl.BlockSpec((tm, N), lambda i: (i, 0)),
            pl.BlockSpec((K, N), lambda i: (0, 0)),
            pl.BlockSpec((1, N), lambda i: (0, 0)),
            pl.BlockSpec((1, N), lambda i: (0, 0)),
            pl.BlockSpec((1, N), lambda i: (0, 0)),
        ],
        out_specs=pl.BlockSpec((tm, N), lambda i: (i, 0)),
        compiler_params=_compiler_params(),
    )(x, residual, w, b.reshape(1, N), gamma.reshape(1, N), beta.reshape(1, N))


# ---------------------------------------------------------------------------
# Kernel 4: fused FFN (relu(x@W1+b1)@W2+b2) + residual add + LayerNorm
#           -> the [tm, dim_ff] intermediate never goes to HBM.
# ---------------------------------------------------------------------------

def _ffn_add_ln_kernel(x_ref, w1_ref, b1_ref, w2_ref, b2_ref, g_ref, beta_ref, o_ref,
                       *, eps):
    x = x_ref[...]
    h = jnp.dot(x, w1_ref[...], preferred_element_type=jnp.float32)
    h = jnp.maximum(h + b1_ref[...].astype(jnp.float32), 0.0)
    acc = jnp.dot(h.astype(x.dtype), w2_ref[...], preferred_element_type=jnp.float32)
    z = acc + b2_ref[...].astype(jnp.float32) + x.astype(jnp.float32)
    mean = jnp.mean(z, axis=-1, keepdims=True)
    c = z - mean
    var = jnp.mean(c * c, axis=-1, keepdims=True)
    zn = c * jax.lax.rsqrt(var + eps)
    o_ref[...] = (zn * g_ref[...].astype(jnp.float32)
                  + beta_ref[...].astype(jnp.float32)).astype(o_ref.dtype)
    # TODO(synk): for very large dim_ff, add a grid reduction axis over dim_ff chunks
    # with an f32 accumulator scratch instead of loading W1/W2 whole into VMEM.


def ffn_add_layernorm(x, w1, b1, w2, b2, gamma, beta, eps=1e-6):
    M, E = x.shape
    F = w1.shape[1]
    assert w2.shape == (F, E)
    tm = _pick_tm(M)
    return pl.pallas_call(
        functools.partial(_ffn_add_ln_kernel, eps=eps),
        out_shape=jax.ShapeDtypeStruct((M, E), x.dtype),
        grid=(M // tm,),
        in_specs=[
            pl.BlockSpec((tm, E), lambda i: (i, 0)),
            pl.BlockSpec((E, F), lambda i: (0, 0)),
            pl.BlockSpec((1, F), lambda i: (0, 0)),
            pl.BlockSpec((F, E), lambda i: (0, 0)),
            pl.BlockSpec((1, E), lambda i: (0, 0)),
            pl.BlockSpec((1, E), lambda i: (0, 0)),
            pl.BlockSpec((1, E), lambda i: (0, 0)),
        ],
        out_specs=pl.BlockSpec((tm, E), lambda i: (i, 0)),
        compiler_params=_compiler_params(),
    )(x, w1, b1.reshape(1, F), w2, b2.reshape(1, E),
      gamma.reshape(1, E), beta.reshape(1, E))


# ---------------------------------------------------------------------------
# EncoderLayer forward
# ---------------------------------------------------------------------------

def encoder_layer_forward(src, src_mask, src_key_padding_mask, params):
    """src: [S, B, E]; src_mask: [S, S] additive float; key_padding_mask: [B, S] bool."""
    S, B, E = src.shape
    H = params["num_heads"]
    d = E // H
    scale = 1.0 / (d ** 0.5)

    # Single relayout to batch-first; everything below stays in [B, S, E] / [B*S, E].
    x_bf = jnp.transpose(src, (1, 0, 2))          # [B, S, E]
    x_flat = x_bf.reshape(B * S, E)

    # --- self attention -----------------------------------------------------
    qkv = matmul_bias(x_flat, params["in_proj_w"], params["in_proj_b"])  # [B*S, 3E]
    qkv = qkv.reshape(B, S, 3 * E)

    # Tiny [B,1,S] padding-bias row (no [B,S,S] bias materialization in HBM).
    pad_bias = jnp.where(src_key_padding_mask, jnp.float32(-1e30),
                         jnp.float32(0.0))[:, None, :]                   # [B, 1, S]

    attn = multihead_attention(qkv, src_mask.astype(jnp.float32), pad_bias,
                               num_heads=H, scale=scale)                 # [B, S, E]
    attn_flat = attn.reshape(B * S, E)

    # out_proj + dropout(eval=identity) + residual + LayerNorm1, fused.
    x1 = proj_add_layernorm(attn_flat, x_flat,
                            params["out_proj_w"], params["out_proj_b"],
                            params["ln1_g"], params["ln1_b"], eps=1e-6)

    # --- feed-forward + dropout(eval=identity) + residual + LayerNorm2, fused.
    x2 = ffn_add_layernorm(x1, params["ff1_w"], params["ff1_b"],
                           params["ff2_w"], params["ff2_b"],
                           params["ln2_g"], params["ln2_b"], eps=1e-6)

    return jnp.transpose(x2.reshape(B, S, E), (1, 0, 2))  # back to [S, B, E]


def init_params(key, embed_size, num_heads, dim_ff):
    ks = jax.random.split(key, 4)
    scale = 0.02
    return {
        "num_heads": num_heads,
        # attention (nn.MultiheadAttention-style) weights, stored [in, out]
        "in_proj_w": scale * jax.random.normal(ks[0], (embed_size, 3 * embed_size), jnp.float32),
        "in_proj_b": jnp.zeros((3 * embed_size,), jnp.float32),
        "out_proj_w": scale * jax.random.normal(ks[1], (embed_size, embed_size), jnp.float32),
        "out_proj_b": jnp.zeros((embed_size,), jnp.float32),
        # feedforward: Linear(E, dim_ff) -> ReLU -> Linear(dim_ff, E)
        "ff1_w": scale * jax.random.normal(ks[2], (embed_size, dim_ff), jnp.float32),
        "ff1_b": jnp.zeros((dim_ff,), jnp.float32),
        "ff2_w": scale * jax.random.normal(ks[3], (dim_ff, embed_size), jnp.float32),
        "ff2_b": jnp.zeros((embed_size,), jnp.float32),
        # layer norms (weight=1, bias=0), eps=1e-6 as in the module spec
        "ln1_g": jnp.ones((embed_size,), jnp.float32),
        "ln1_b": jnp.zeros((embed_size,), jnp.float32),
        "ln2_g": jnp.ones((embed_size,), jnp.float32),
        "ln2_b": jnp.zeros((embed_size,), jnp.float32),
    }


if __name__ == "__main__":
    S, B, E, H, FF = 8, 2, 32, 4, 64

    key = jax.random.PRNGKey(0)
    k_src, k_params = jax.random.split(key)

    src = jax.random.normal(k_src, (S, B, E), jnp.float32)

    # additive causal float mask [S, S] (large finite negative avoids NaN rows)
    causal = jnp.tril(jnp.ones((S, S), dtype=bool))
    src_mask = jnp.where(causal, 0.0, -1e9).astype(jnp.float32)
    # boolean key padding mask [B, S]: last token of batch 1 is padding
    src_key_padding_mask = jnp.zeros((B, S), dtype=bool).at[1, S - 1].set(True)

    params = init_params(k_params, E, H, FF)

    out = encoder_layer_forward(src, src_mask, src_key_padding_mask, params)
    out = jax.block_until_ready(out)
    assert out.shape == (S, B, E) and out.dtype == jnp.float32
    assert bool(jnp.all(jnp.isfinite(out)))
    print("KERNEL_OK")
</pallas_src>

<mosaic_0001>
module attributes {stable_mosaic.version = 11 : i64} {
  func.func @_matmul_bias_kernel(%arg0: i32, %arg1: memref<16x32xf32, #tpu.memory_space<vmem>>, %arg2: memref<32x96xf32, #tpu.memory_space<vmem>>, %arg3: memref<1x96xf32, #tpu.memory_space<vmem>>, %arg4: memref<16x96xf32, #tpu.memory_space<vmem>>) attributes {dimension_semantics = [#tpu.dimension_semantics<parallel>], iteration_bounds = array<i64: 1>, scalar_prefetch = 0 : i64, scratch_operands = 0 : i64, tpu.core_type = #tpu.core_type<tc>, window_params = [{transform_indices = @transform_0, window_bounds = array<i64: 16, 32>}, {pipeline_mode = #tpu.pipeline_mode<synchronous>, transform_indices = @transform_1, window_bounds = array<i64: 32, 96>}, {pipeline_mode = #tpu.pipeline_mode<synchronous>, transform_indices = @transform_2, window_bounds = array<i64: 1, 96>}, {transform_indices = @transform_3, window_bounds = array<i64: 16, 96>}]} {
    %c0 = arith.constant 0 : index
    %c0_0 = arith.constant 0 : index
    %0 = vector.load %arg1[%c0, %c0_0] : memref<16x32xf32, #tpu.memory_space<vmem>>, vector<16x32xf32>
    %c0_1 = arith.constant 0 : index
    %c0_2 = arith.constant 0 : index
    %1 = vector.load %arg2[%c0_1, %c0_2] : memref<32x96xf32, #tpu.memory_space<vmem>>, vector<32x96xf32>
    %cst = arith.constant dense<0.000000e+00> : vector<16x96xf32>
    %2 = tpu.matmul %0, %1, %cst {dimension_numbers = #tpu.dot_dimension_numbers<[1], [0], [0], [1], [0, 0, 1, 1], [], []>} : vector<16x32xf32>, vector<32x96xf32>, vector<16x96xf32> -> vector<16x96xf32>
    %c0_3 = arith.constant 0 : index
    %c0_4 = arith.constant 0 : index
    %3 = vector.load %arg3[%c0_3, %c0_4] : memref<1x96xf32, #tpu.memory_space<vmem>>, vector<1x96xf32>
    %4 = vector.broadcast %3 : vector<1x96xf32> to vector<16x96xf32>
    %5 = arith.addf %2, %4 : vector<16x96xf32>
    %c0_5 = arith.constant 0 : index
    %c0_6 = arith.constant 0 : index
    %6 = vector.load %arg4[%c0_5, %c0_6] : memref<16x96xf32, #tpu.memory_space<vmem>>, vector<16x96xf32>
    tpu.vector_store %arg4[%c0_5, %c0_6], %5 {strides = array<i32>} : memref<16x96xf32, #tpu.memory_space<vmem>>, vector<16x96xf32>,
    return
  }
  func.func @transform_0(%arg0: i32) -> (i32, i32) {
    %c0_i32 = arith.constant 0 : i32
    %c0_i32_0 = arith.constant 0 : i32
    return %arg0, %c0_i32 : i32, i32
  }
  func.func @transform_1(%arg0: i32) -> (i32, i32) {
    %c0_i32 = arith.constant 0 : i32
    %c0_i32_0 = arith.constant 0 : i32
    %c0_i32_1 = arith.constant 0 : i32
    return %c0_i32, %c0_i32_0 : i32, i32
  }
  func.func @transform_2(%arg0: i32) -> (i32, i32) {
    %c0_i32 = arith.constant 0 : i32
    %c0_i32_0 = arith.constant 0 : i32
    %c0_i32_1 = arith.constant 0 : i32
    return %c0_i32, %c0_i32_0 : i32, i32
  }
  func.func @transform_3(%arg0: i32) -> (i32, i32) {
    %c0_i32 = arith.constant 0 : i32
    %c0_i32_0 = arith.constant 0 : i32
    return %arg0, %c0_i32 : i32, i32
  }
}

</mosaic_0001>

<llo_original>
// kernel: tpu_custom_call.1
$region0: #{tpu_custom_call.1}
  #allocation0 [shape = 'u32[]', space=smem, size = 0x4, offset = 0x4, fixed_abs, tag = 'smem constant byte address 0x4 - core index']
  #allocation1 [shape = 'u32[72,128]{1,0:T(1,128)}', space=vmem, size = 0x9000, scoped, tag = 'internal scratch']
  %s0 = inlined_call_operand.hbm [shape: f32[16,32], index: 0, kind: input, shape index: {}]
  %s1 = inlined_call_operand.hbm [shape: f32[32,96], index: 1, kind: input, shape index: {}]
  %s2 = inlined_call_operand.vmem [shape: f32[1,96], index: 2, kind: input, shape index: {}]
  %s3 = inlined_call_operand.hbm [shape: f32[16,96], index: 3, kind: output, shape index: {}]
  %s4 = sld [smem:[#allocation0]]
  $region30: #{tpu_custom_call.1} parent=0
    _
  %s6 = ssub.s32 1, %s4
  %s7 = scalar_select 0, %s6, %s4
  $region1: #{tpu_custom_call.1} parent=0
    #allocation2 [shape = 'u8[8192]{0}', space=vmem, size = 0x2000, scoped, tag = 'input window, operand 0, single buffered']
    #allocation3 [shape = 's32[1]{0}', space=sflag, size = 0x4, scoped, tag = 'scoped memory for tpu_custom_call.1']
    #allocation4 [shape = 's32[1]{0}', space=sflag, size = 0x4, scoped, tag = 'scoped memory for tpu_custom_call.1']
    #allocation5 [shape = 'u8[16384]{0}', space=vmem, size = 0x4000, scoped, tag = 'input window, operand 1, single buffered']
    #allocation6 [shape = 's32[1]{0}', space=sflag, size = 0x4, scoped, tag = 'scoped memory for tpu_custom_call.1']
    #allocation7 [shape = 'u8[8192]{0}', space=vmem, size = 0x2000, scoped, tag = 'output window, operand 0, single buffered']
    %8 = vsyncpa [#allocation3], 0
    %9 = vsyncpa [#allocation6], 0
    %10 = vsyncpa [#allocation4], 0
    // Predicated region
    $region2: #{tpu_custom_call.1} parent=1 // pred_check
      _
    $region3: #{tpu_custom_call.1} parent=1 // pred_check_branch
      %12 = sbr.rel (0) target = $region5
    $region4: #{tpu_custom_call.1} parent=1 // pred_region
      %14 = vsyncadd [#allocation3], 0
      %s15 = sshll.u32 %s0, 4
      %s16 = int_to_ptr.hbm [resolvable:$true] %s15
      %s17 = sshll.u32 [#allocation2], 4
      %s18 = int_to_ptr.vmem [resolvable:$true] %s17
      %23 = dma.hbm_to_vmem [thread:$0]  %s16, 256, %s18, [#allocation3], 128, 128, 8
    $region5: #{tpu_custom_call.1} parent=1 // pred_fallthru
      _
    // Predicated region
    $region6: #{tpu_custom_call.1} parent=1 // pred_check
      _
    $region7: #{tpu_custom_call.1} parent=1 // pred_check_branch
      %25 = sbr.rel (0) target = $region9
    $region8: #{tpu_custom_call.1} parent=1 // pred_region
      %27 = vsyncadd [#allocation6], 0
      %s28 = sshll.u32 %s1, 4
      %s29 = int_to_ptr.hbm [resolvable:$true] %s28
      %s30 = sshll.u32 [#allocation5], 4
      %s31 = int_to_ptr.vmem [resolvable:$true] %s30
      %36 = dma.hbm_to_vmem [thread:$0]  %s29, 512, %s31, [#allocation6], 128, 128, 8
    $region9: #{tpu_custom_call.1} parent=1 // pred_fallthru
      _
    // Predicated region
    $region10: #{tpu_custom_call.1} parent=1 // pred_check
      _
    $region11: #{tpu_custom_call.1} parent=1 // pred_check_branch
      %38 = sbr.rel (0) target = $region13
    $region12: #{tpu_custom_call.1} parent=1 // pred_region
      _
    $region13: #{tpu_custom_call.1} parent=1 // pred_fallthru
      _
    // Predicated region
    $region14: #{tpu_custom_call.1} parent=1 // pred_check
      _
    $region15: #{tpu_custom_call.1} parent=1 // pred_check_branch
      %40 = sbr.rel (0) target = $region17
    $region16: #{tpu_custom_call.1} parent=1 // pred_region
      %42 = dma.done [#allocation3], 256
    $region17: #{tpu_custom_call.1} parent=1 // pred_fallthru
      _
    // Predicated region
    $region18: #{tpu_custom_call.1} parent=1 // pred_check
      _
    $region19: #{tpu_custom_call.1} parent=1 // pred_check_branch
      %44 = sbr.rel (0) target = $region21
    $region20: #{tpu_custom_call.1} parent=1 // pred_region
      %46 = dma.done [#allocation6], 512
    $region21: #{tpu_custom_call.1} parent=1 // pred_fallthru
      _
    %v47 = vld [vmem:[#allocation2] sm:$0xff]
    %v48 = vld [vmem:[#allocation2 + $0x8] sm:$0xff]
    %v49 = vld [vmem:[#allocation5] sm:$0xff]
    %v50 = vld [vmem:[#allocation5 + $0x8] sm:$0xff]
    %v51 = vld [vmem:[#allocation5 + $0x10] sm:$0xff]
    %v52 = vld [vmem:[#allocation5 + $0x18] sm:$0xff]
    %v53 = vld [vmem:[%s2] sm:$0x1]
    %v55 = vperm.slane %v53, 0
    %vm57 = vcmask 261120
    %v59 = vsel %vm57, %v47, 0
    %v62 = vsel %vm57, %v48, 0
    %64 = vmatpush.msra.mxu0 0.0
    %65 = vmatpush.msra.mxu0 0.0
    %66 = vmatpush.msra.mxu0 0.0
    %67 = vmatpush.msra.mxu0 0.0
    %68 = vmatpush.msra.mxu0 0.0
    %69 = vmatpush.msra.mxu0 0.0
    %70 = vmatpush.msra.mxu0 0.0
    %71 = vmatpush.msra.mxu0 0.0
    %72 = vmatpush.msra.mxu0 0.0
    %73 = vmatpush.msra.mxu0 0.0
    %74 = vmatpush.msra.mxu0 0.0
    %75 = vmatpush.msra.mxu0 0.0
    %76 = vmatpush.msra.mxu0 %v52
    %77 = vmatpush.msra.mxu0 %v51
    %78 = vmatpush.msra.mxu0 %v50
    %79 = vmatpush.msra.mxu0 %v49
    %80 = vmatmul.f32.gmra.mxu0 %v59
    %v81 = vpop.f32.mrf.mxu0
    %v82 = vadd.f32 %v55, %v81
    %83 = vmatmul.f32.gmra.mxu0 %v62
    %v84 = vpop.f32.mrf.mxu0
    %v85 = vadd.f32 %v55, %v84
    %86 = vdwg.mxu0
    %vm87 = vcmask 785408
    %88 = vst.msk [vmem:[#allocation7] sm:$0xff] %vm87, %v82
    %89 = vst.msk [vmem:[#allocation7 + $0x8] sm:$0xff] %vm87, %v85
    // Predicated region
    $region22: #{tpu_custom_call.1} parent=1 // pred_check
      _
    $region23: #{tpu_custom_call.1} parent=1 // pred_check_branch
      %91 = sbr.rel (0) target = $region25
    $region24: #{tpu_custom_call.1} parent=1 // pred_region
      %93 = vsyncadd [#allocation4], 0
      %s94 = sshll.u32 [#allocation7], 4
      %s95 = int_to_ptr.vmem [resolvable:$true] %s94
      %s96 = sshll.u32 %s3, 4
      %s97 = int_to_ptr.hbm [resolvable:$true] %s96
      %102 = dma.vmem_to_hbm [thread:$0]  %s95, 256, %s97, [#allocation4], 128, 128, 8
    $region25: #{tpu_custom_call.1} parent=1 // pred_fallthru
      _
    // Predicated region
    $region26: #{tpu_custom_call.1} parent=1 // pred_check
      _
    $region27: #{tpu_custom_call.1} parent=1 // pred_check_branch
      %104 = sbr.rel (0) target = $region29
    $region28: #{tpu_custom_call.1} parent=1 // pred_region
      %106 = dma.done [#allocation4], 256
    $region29: #{tpu_custom_call.1} parent=1 // pred_fallthru
      _
    %107 = vsyncpa [#allocation3], 1
    %108 = vsyncpa [#allocation6], 1
    %109 = vsyncpa [#allocation4], 1

</llo_original>
